<compile_context>
chip_gen: v5e
topology: v5e:2x2
jax: 0.10.0
libtpu: 0.0.40
codegen_flags: <defaults>
</compile_context>

<pallas_src>
import jax
import jax.numpy as jnp
from jax.experimental import pallas as pl
from jax.experimental.pallas import tpu as pltpu

FC1_UNITS = 128
FC2_UNITS = 64
LANE = 128        # lane-dense padding width for hidden / output dims
MAX_TILE_B = 1024  # largest batch tile (rows) per grid step


def _round_up(n, m):
    return ((n + m - 1) // m) * m


# ----------------------------- kernel --------------------------------------


def _mlp128_kernel(x_ref, w1_ref, b1_ref, w2_ref, b2_ref, w3_ref, b3_ref, o_ref):
    """fc1 -> relu -> fc2 -> relu -> fc3, all hidden/output dims padded to 128.

    Works for both the plain and the dueling network: the dueling streams are
    fused into the packed w2/w3 at pack_params() time.  f32 accumulation and
    f32 bias/ReLU regardless of the (possibly bf16) MXU input dtype.
    """
    x = x_ref[...].astype(w1_ref.dtype)                       # in-kernel cast
    h1 = jnp.dot(x, w1_ref[...], preferred_element_type=jnp.float32)
    h1 = jnp.maximum(h1 + b1_ref[...], 0.0)
    h2 = jnp.dot(h1.astype(w2_ref.dtype), w2_ref[...],
                 preferred_element_type=jnp.float32)
    h2 = jnp.maximum(h2 + b2_ref[...], 0.0)
    y = jnp.dot(h2.astype(w3_ref.dtype), w3_ref[...],
                preferred_element_type=jnp.float32)
    o_ref[...] = (y + b3_ref[...]).astype(o_ref.dtype)


# ----------------------------- packing (hoisted, run once) ------------------


def pack_params(params, dueling=False, compute_dtype=jnp.float32):
    """Pack + pre-cast weights once (NOT per forward call).

    Plain:   w2/b2 zero-padded 64->128 lanes, w3/b3 zero-padded A->128 lanes.
    Dueling: w2 = [w2_val || w2_adv] (128,128);
             w3 packed so y[:, a] = val + adv_a (a < A), y[:, A] = val.
    """
    w1 = params["w1"].astype(compute_dtype)
    b1 = params["b1"]

    if not dueling:
        a = params["w3"].shape[1]
        w2 = jnp.zeros((FC1_UNITS, LANE), jnp.float32).at[:, :FC2_UNITS].set(params["w2"])
        b2 = jnp.zeros((1, LANE), jnp.float32).at[:, :FC2_UNITS].set(params["b2"])
        w3 = jnp.zeros((LANE, LANE), jnp.float32).at[:FC2_UNITS, :a].set(params["w3"])
        b3 = jnp.zeros((1, LANE), jnp.float32).at[:, :a].set(params["b3"])
    else:
        a = params["w3_adv"].shape[1]
        assert a + 1 <= LANE
        w2 = jnp.concatenate([params["w2_val"], params["w2_adv"]], axis=1)   # (128,128)
        b2 = jnp.concatenate([params["b2_val"], params["b2_adv"]], axis=1)   # (1,128)

        w3v = params["w3_val"]   # (64, 1)
        w3a = params["w3_adv"]   # (64, A)
        w3 = jnp.zeros((2 * FC2_UNITS, LANE), jnp.float32)
        # value-stream rows -> every action column + a pure-value column A
        w3 = w3.at[:FC2_UNITS, :a].set(jnp.broadcast_to(w3v, (FC2_UNITS, a)))
        w3 = w3.at[:FC2_UNITS, a].set(w3v[:, 0])
        # advantage-stream rows -> their own action columns
        w3 = w3.at[FC2_UNITS:, :a].set(w3a)

        b3 = jnp.zeros((1, LANE), jnp.float32)
        b3 = b3.at[0, :a].set(params["b3_val"][0, 0] + params["b3_adv"][0, :])
        b3 = b3.at[0, a].set(params["b3_val"][0, 0])

    return {
        "w1": w1, "b1": b1,
        "w2": w2.astype(compute_dtype), "b2": b2,
        "w3": w3.astype(compute_dtype), "b3": b3,
        "action_size": int(a), "dueling": bool(dueling),
    }


# ----------------------------- forward wrapper ------------------------------


def qnetwork_forward(x, packed):
    """Forward pass matching QNetwork.forward.

    x: (batch, state_size) float32; packed: output of pack_params().
    """
    batch, state_size = x.shape
    a = packed["action_size"]

    # Pad batch only to the sublane multiple (8), never to the tile size.
    b_pad = _round_up(batch, 8)
    xk = x if b_pad == batch else jnp.pad(x, ((0, b_pad - batch), (0, 0)))

    # Tile selection: biggest tile <= MAX_TILE_B, but guarantee >= 2 grid
    # steps whenever the batch allows so the 'parallel' axis shards across
    # both v7x TensorCores.  Ragged last block handled by pl.cdiv.
    half = _round_up(-(-b_pad // 2), 8)
    tb = max(8, min(MAX_TILE_B, half))
    grid = pl.cdiv(b_pad, tb)

    w1, b1 = packed["w1"], packed["b1"]
    w2, b2 = packed["w2"], packed["b2"]
    w3, b3 = packed["w3"], packed["b3"]
    args = (xk, w1, b1, w2, b2, w3, b3)

    flops = 2 * b_pad * (state_size * FC1_UNITS + FC1_UNITS * LANE + LANE * LANE)
    nbytes = sum(int(v.size) * v.dtype.itemsize for v in args) + b_pad * LANE * 4

    def wspec(p):  # grid-invariant (VMEM-resident) weight/bias blocks
        return pl.BlockSpec(p.shape, lambda i: (0, 0))

    out = pl.pallas_call(
        _mlp128_kernel,
        out_shape=jax.ShapeDtypeStruct((b_pad, LANE), jnp.float32),
        grid_spec=pltpu.PrefetchScalarGridSpec(
            num_scalar_prefetch=0,
            grid=(grid,),
            in_specs=[
                pl.BlockSpec((tb, state_size), lambda i: (i, 0)),
                wspec(w1), wspec(b1), wspec(w2), wspec(b2), wspec(w3), wspec(b3),
            ],
            out_specs=pl.BlockSpec((tb, LANE), lambda i: (i, 0)),
        ),
        compiler_params=pltpu.CompilerParams(
            dimension_semantics=("parallel",),
            vmem_limit_bytes=32 * 1024 * 1024),
        cost_estimate=pl.CostEstimate(flops=int(flops), transcendentals=0,
                                      bytes_accessed=int(nbytes)),
    )(*args)

    if not packed["dueling"]:
        return out[:batch, :a]

    # Dueling: kernel emitted cols 0:A = val + adv_a and col A = val.  The
    # global adv.mean() (over the whole (batch, A) tensor, as in PyTorch)
    # couples batch rows, so it is recovered here with tiny XLA ops on the
    # sliced output -- pad rows are excluded by construction.
    qa = out[:batch, :a]           # val + adv
    val = out[:batch, a:a + 1]     # val
    adv_mean = jnp.mean(qa - val)
    return qa - adv_mean


# ----------------------------- params ---------------------------------------


def _linear_init(key, fan_in, fan_out):
    """PyTorch nn.Linear default init: U(-1/sqrt(fan_in), 1/sqrt(fan_in))."""
    kw, kb = jax.random.split(key)
    bound = 1.0 / jnp.sqrt(jnp.float32(fan_in))
    w = jax.random.uniform(kw, (fan_in, fan_out), jnp.float32, -bound, bound)
    b = jax.random.uniform(kb, (1, fan_out), jnp.float32, -bound, bound)
    return w, b


def make_params(key, state_size, action_size, dueling=False):
    keys = jax.random.split(key, 8)
    params = {}
    params["w1"], params["b1"] = _linear_init(keys[0], state_size, FC1_UNITS)
    if not dueling:
        params["w2"], params["b2"] = _linear_init(keys[1], FC1_UNITS, FC2_UNITS)
        params["w3"], params["b3"] = _linear_init(keys[2], FC2_UNITS, action_size)
    else:
        params["w2_val"], params["b2_val"] = _linear_init(keys[3], FC1_UNITS, FC2_UNITS)
        params["w2_adv"], params["b2_adv"] = _linear_init(keys[4], FC1_UNITS, FC2_UNITS)
        params["w3_val"], params["b3_val"] = _linear_init(keys[5], FC2_UNITS, 1)
        params["w3_adv"], params["b3_adv"] = _linear_init(keys[6], FC2_UNITS, action_size)
    return params


# ----------------------------- reference ------------------------------------


def reference_forward(x, params, dueling=False):
    relu = lambda v: jnp.maximum(v, 0.0)
    h1 = relu(x @ params["w1"] + params["b1"])
    if not dueling:
        h2 = relu(h1 @ params["w2"] + params["b2"])
        return h2 @ params["w3"] + params["b3"]
    hv = relu(h1 @ params["w2_val"] + params["b2_val"])
    ha = relu(h1 @ params["w2_adv"] + params["b2_adv"])
    val = hv @ params["w3_val"] + params["b3_val"]
    adv = ha @ params["w3_adv"] + params["b3_adv"]
    return val + adv - adv.mean()


# ----------------------------- main ------------------------------------------


if __name__ == "__main__":
    key = jax.random.PRNGKey(0)
    k_x, k_x2, k_p1, k_p2 = jax.random.split(key, 4)

    state_size = 16
    action_size = 4

    params = make_params(k_p1, state_size, action_size, dueling=False)
    dparams = make_params(k_p2, state_size, action_size, dueling=True)

    # Pack / pre-cast weights ONCE (hoisted out of the per-call forward).
    packed = pack_params(params, dueling=False)
    packed_bf16 = pack_params(params, dueling=False, compute_dtype=jnp.bfloat16)
    dpacked = pack_params(dparams, dueling=True)

    x = jax.random.normal(k_x, (8, state_size), jnp.float32)
    xb = jax.random.normal(k_x2, (300, state_size), jnp.float32)

    # plain path, small batch (single grid step)
    out = jax.block_until_ready(qnetwork_forward(x, packed))
    ref = reference_forward(x, params, dueling=False)
    assert out.shape == (8, action_size)
    assert jnp.allclose(out, ref, atol=1e-4, rtol=1e-4)

    # plain path, ragged batch (2 grid steps -> both v7x TCs, sublane-only pad)
    outb = jax.block_until_ready(qnetwork_forward(xb, packed))
    refb = reference_forward(xb, params, dueling=False)
    assert outb.shape == (300, action_size)
    assert jnp.allclose(outb, refb, atol=1e-4, rtol=1e-4)

    # plain path, bf16 MXU inputs (x cast in-kernel), f32 accumulation
    outbf = jax.block_until_ready(qnetwork_forward(xb, packed_bf16))
    assert outbf.shape == (300, action_size)
    assert jnp.allclose(outbf, refb, atol=1e-1, rtol=1e-1)

    # dueling path, small batch (fused streams, mean recovered in wrapper)
    dout = jax.block_until_ready(qnetwork_forward(x, dpacked))
    dref = reference_forward(x, dparams, dueling=True)
    assert dout.shape == (8, action_size)
    assert jnp.allclose(dout, dref, atol=1e-4, rtol=1e-4)

    # dueling path, ragged batch (gridded; pad rows excluded from the mean)
    doutb = jax.block_until_ready(qnetwork_forward(xb, dpacked))
    drefb = reference_forward(xb, dparams, dueling=True)
    assert doutb.shape == (300, action_size)
    assert jnp.allclose(doutb, drefb, atol=1e-4, rtol=1e-4)

    print("KERNEL_OK")
</pallas_src>

<mosaic_0001>
module attributes {stable_mosaic.version = 11 : i64} {
  func.func @_mlp128_kernel(%arg0: i32, %arg1: memref<8x16xf32, #tpu.memory_space<vmem>>, %arg2: memref<16x128xf32, #tpu.memory_space<vmem>>, %arg3: memref<1x128xf32, #tpu.memory_space<vmem>>, %arg4: memref<128x128xf32, #tpu.memory_space<vmem>>, %arg5: memref<1x128xf32, #tpu.memory_space<vmem>>, %arg6: memref<128x128xf32, #tpu.memory_space<vmem>>, %arg7: memref<1x128xf32, #tpu.memory_space<vmem>>, %arg8: memref<8x128xf32, #tpu.memory_space<vmem>>) attributes {dimension_semantics = [#tpu.dimension_semantics<parallel>], iteration_bounds = array<i64: 1>, scalar_prefetch = 0 : i64, scratch_operands = 0 : i64, tpu.core_type = #tpu.core_type<tc>, window_params = [{transform_indices = @transform_0, window_bounds = array<i64: 8, 16>}, {pipeline_mode = #tpu.pipeline_mode<synchronous>, transform_indices = @transform_1, window_bounds = array<i64: 16, 128>}, {pipeline_mode = #tpu.pipeline_mode<synchronous>, transform_indices = @transform_2, window_bounds = array<i64: 1, 128>}, {pipeline_mode = #tpu.pipeline_mode<synchronous>, transform_indices = @transform_3, window_bounds = array<i64: 128, 128>}, {pipeline_mode = #tpu.pipeline_mode<synchronous>, transform_indices = @transform_4, window_bounds = array<i64: 1, 128>}, {pipeline_mode = #tpu.pipeline_mode<synchronous>, transform_indices = @transform_5, window_bounds = array<i64: 128, 128>}, {pipeline_mode = #tpu.pipeline_mode<synchronous>, transform_indices = @transform_6, window_bounds = array<i64: 1, 128>}, {transform_indices = @transform_7, window_bounds = array<i64: 8, 128>}]} {
    %c0 = arith.constant 0 : index
    %c0_0 = arith.constant 0 : index
    %0 = vector.load %arg1[%c0, %c0_0] : memref<8x16xf32, #tpu.memory_space<vmem>>, vector<8x16xf32>
    %c0_1 = arith.constant 0 : index
    %c0_2 = arith.constant 0 : index
    %1 = vector.load %arg2[%c0_1, %c0_2] : memref<16x128xf32, #tpu.memory_space<vmem>>, vector<16x128xf32>
    %cst = arith.constant dense<0.000000e+00> : vector<8x128xf32>
    %2 = tpu.matmul %0, %1, %cst {dimension_numbers = #tpu.dot_dimension_numbers<[1], [0], [0], [1], [0, 0, 1, 1], [], []>} : vector<8x16xf32>, vector<16x128xf32>, vector<8x128xf32> -> vector<8x128xf32>
    %c0_3 = arith.constant 0 : index
    %c0_4 = arith.constant 0 : index
    %3 = vector.load %arg3[%c0_3, %c0_4] : memref<1x128xf32, #tpu.memory_space<vmem>>, vector<1x128xf32>
    %4 = vector.broadcast %3 : vector<1x128xf32> to vector<8x128xf32>
    %5 = arith.addf %2, %4 : vector<8x128xf32>
    %cst_5 = arith.constant 0.000000e+00 : f32
    %6 = vector.broadcast %cst_5 : f32 to vector<8x128xf32>
    %7 = arith.maximumf %5, %6 : vector<8x128xf32>
    %c0_6 = arith.constant 0 : index
    %c0_7 = arith.constant 0 : index
    %8 = vector.load %arg4[%c0_6, %c0_7] : memref<128x128xf32, #tpu.memory_space<vmem>>, vector<128x128xf32>
    %cst_8 = arith.constant dense<0.000000e+00> : vector<8x128xf32>
    %9 = tpu.matmul %7, %8, %cst_8 {dimension_numbers = #tpu.dot_dimension_numbers<[1], [0], [0], [1], [0, 0, 1, 1], [], []>} : vector<8x128xf32>, vector<128x128xf32>, vector<8x128xf32> -> vector<8x128xf32>
    %c0_9 = arith.constant 0 : index
    %c0_10 = arith.constant 0 : index
    %10 = vector.load %arg5[%c0_9, %c0_10] : memref<1x128xf32, #tpu.memory_space<vmem>>, vector<1x128xf32>
    %11 = vector.broadcast %10 : vector<1x128xf32> to vector<8x128xf32>
    %12 = arith.addf %9, %11 : vector<8x128xf32>
    %cst_11 = arith.constant 0.000000e+00 : f32
    %13 = vector.broadcast %cst_11 : f32 to vector<8x128xf32>
    %14 = arith.maximumf %12, %13 : vector<8x128xf32>
    %c0_12 = arith.constant 0 : index
    %c0_13 = arith.constant 0 : index
    %15 = vector.load %arg6[%c0_12, %c0_13] : memref<128x128xf32, #tpu.memory_space<vmem>>, vector<128x128xf32>
    %cst_14 = arith.constant dense<0.000000e+00> : vector<8x128xf32>
    %16 = tpu.matmul %14, %15, %cst_14 {dimension_numbers = #tpu.dot_dimension_numbers<[1], [0], [0], [1], [0, 0, 1, 1], [], []>} : vector<8x128xf32>, vector<128x128xf32>, vector<8x128xf32> -> vector<8x128xf32>
    %c0_15 = arith.constant 0 : index
    %c0_16 = arith.constant 0 : index
    %17 = vector.load %arg7[%c0_15, %c0_16] : memref<1x128xf32, #tpu.memory_space<vmem>>, vector<1x128xf32>
    %18 = vector.broadcast %17 : vector<1x128xf32> to vector<8x128xf32>
    %19 = arith.addf %16, %18 : vector<8x128xf32>
    %c0_17 = arith.constant 0 : index
    %c0_18 = arith.constant 0 : index
    %20 = vector.load %arg8[%c0_17, %c0_18] : memref<8x128xf32, #tpu.memory_space<vmem>>, vector<8x128xf32>
    tpu.vector_store %arg8[%c0_17, %c0_18], %19 {strides = array<i32>} : memref<8x128xf32, #tpu.memory_space<vmem>>, vector<8x128xf32>,
    return
  }
  func.func @transform_0(%arg0: i32) -> (i32, i32) {
    %c0_i32 = arith.constant 0 : i32
    %c0_i32_0 = arith.constant 0 : i32
    return %arg0, %c0_i32 : i32, i32
  }
  func.func @transform_1(%arg0: i32) -> (i32, i32) {
    %c0_i32 = arith.constant 0 : i32
    %c0_i32_0 = arith.constant 0 : i32
    %c0_i32_1 = arith.constant 0 : i32
    return %c0_i32, %c0_i32_0 : i32, i32
  }
  func.func @transform_2(%arg0: i32) -> (i32, i32) {
    %c0_i32 = arith.constant 0 : i32
    %c0_i32_0 = arith.constant 0 : i32
    %c0_i32_1 = arith.constant 0 : i32
    return %c0_i32, %c0_i32_0 : i32, i32
  }
  func.func @transform_3(%arg0: i32) -> (i32, i32) {
    %c0_i32 = arith.constant 0 : i32
    %c0_i32_0 = arith.constant 0 : i32
    %c0_i32_1 = arith.constant 0 : i32
    return %c0_i32, %c0_i32_0 : i32, i32
  }
  func.func @transform_4(%arg0: i32) -> (i32, i32) {
    %c0_i32 = arith.constant 0 : i32
    %c0_i32_0 = arith.constant 0 : i32
    %c0_i32_1 = arith.constant 0 : i32
    return %c0_i32, %c0_i32_0 : i32, i32
  }
  func.func @transform_5(%arg0: i32) -> (i32, i32) {
    %c0_i32 = arith.constant 0 : i32
    %c0_i32_0 = arith.constant 0 : i32
    %c0_i32_1 = arith.constant 0 : i32
    return %c0_i32, %c0_i32_0 : i32, i32
  }
  func.func @transform_6(%arg0: i32) -> (i32, i32) {
    %c0_i32 = arith.constant 0 : i32
    %c0_i32_0 = arith.constant 0 : i32
    %c0_i32_1 = arith.constant 0 : i32
    return %c0_i32, %c0_i32_0 : i32, i32
  }
  func.func @transform_7(%arg0: i32) -> (i32, i32) {
    %c0_i32 = arith.constant 0 : i32
    %c0_i32_0 = arith.constant 0 : i32
    return %arg0, %c0_i32 : i32, i32
  }
}

</mosaic_0001>

<llo_original>
// kernel: tpu_custom_call.1
$region0: #{tpu_custom_call.1}
  #allocation0 [shape = 'u32[]', space=smem, size = 0x4, offset = 0x4, fixed_abs, tag = 'smem constant byte address 0x4 - core index']
  #allocation1 [shape = 'u32[72,128]{1,0:T(1,128)}', space=vmem, size = 0x9000, scoped, tag = 'internal scratch']
  %s0 = inlined_call_operand.hbm [shape: f32[8,16], index: 0, kind: input, shape index: {}]
  %s1 = inlined_call_operand.hbm [shape: f32[16,128], index: 1, kind: input, shape index: {}]
  %s2 = inlined_call_operand.vmem [shape: f32[1,128], index: 2, kind: input, shape index: {}]
  %s3 = inlined_call_operand.hbm [shape: f32[128,128], index: 3, kind: input, shape index: {}]
  %s4 = inlined_call_operand.vmem [shape: f32[1,128], index: 4, kind: input, shape index: {}]
  %s5 = inlined_call_operand.hbm [shape: f32[128,128], index: 5, kind: input, shape index: {}]
  %s6 = inlined_call_operand.vmem [shape: f32[1,128], index: 6, kind: input, shape index: {}]
  %s7 = inlined_call_operand.hbm [shape: f32[8,128], index: 7, kind: output, shape index: {}]
  %s8 = sld [smem:[#allocation0]]
  $region54: #{tpu_custom_call.1} parent=0
    _
  %s10 = ssub.s32 1, %s8
  %s11 = scalar_select 0, %s10, %s8
  $region1: #{tpu_custom_call.1} parent=0
    #allocation2 [shape = 'u8[4096]{0}', space=vmem, size = 0x1000, scoped, tag = 'input window, operand 0, single buffered']
    #allocation3 [shape = 's32[1]{0}', space=sflag, size = 0x4, scoped, tag = 'scoped memory for tpu_custom_call.1']
    #allocation4 [shape = 's32[1]{0}', space=sflag, size = 0x4, scoped, tag = 'scoped memory for tpu_custom_call.1']
    #allocation5 [shape = 'u8[8192]{0}', space=vmem, size = 0x2000, scoped, tag = 'input window, operand 1, single buffered']
    #allocation6 [shape = 's32[1]{0}', space=sflag, size = 0x4, scoped, tag = 'scoped memory for tpu_custom_call.1']
    #allocation7 [shape = 'u8[65536]{0}', space=vmem, size = 0x10000, scoped, tag = 'input window, operand 3, single buffered']
    #allocation8 [shape = 'u8[65536]{0}', space=vmem, size = 0x10000, scoped, tag = 'input window, operand 5, single buffered']
    #allocation9 [shape = 's32[1]{0}', space=sflag, size = 0x4, scoped, tag = 'scoped memory for tpu_custom_call.1']
    #allocation10 [shape = 'u8[4096]{0}', space=vmem, size = 0x1000, scoped, tag = 'output window, operand 0, single buffered']
    %12 = vsyncpa [#allocation3], 0
    %13 = vsyncpa [#allocation6], 0
    %14 = vsyncpa [#allocation9], 0
    %15 = vsyncpa [#allocation4], 0
    // Predicated region
    $region2: #{tpu_custom_call.1} parent=1 // pred_check
      _
    $region3: #{tpu_custom_call.1} parent=1 // pred_check_branch
      %17 = sbr.rel (0) target = $region5
    $region4: #{tpu_custom_call.1} parent=1 // pred_region
      %19 = vsyncadd [#allocation3], 0
      %s21 = sshll.u32 %s0, 4
      %s22 = int_to_ptr.hbm [resolvable:$true] %s21
      %s23 = sshll.u32 [#allocation2], 4
      %s24 = int_to_ptr.vmem [resolvable:$true] %s23
      %26 = dma.hbm_to_vmem [thread:$0]  %s22, 128, %s24, [#allocation3]
    $region5: #{tpu_custom_call.1} parent=1 // pred_fallthru
      _
    // Predicated region
    $region6: #{tpu_custom_call.1} parent=1 // pred_check
      _
    $region7: #{tpu_custom_call.1} parent=1 // pred_check_branch
      %28 = sbr.rel (0) target = $region9
    $region8: #{tpu_custom_call.1} parent=1 // pred_region
      %30 = vsyncadd [#allocation6], 0
      %s31 = sshll.u32 %s1, 4
      %s32 = int_to_ptr.hbm [resolvable:$true] %s31
      %s33 = sshll.u32 [#allocation5], 4
      %s34 = int_to_ptr.vmem [resolvable:$true] %s33
      %39 = dma.hbm_to_vmem [thread:$0]  %s32, 256, %s34, [#allocation6], 128, 128, 8
    $region9: #{tpu_custom_call.1} parent=1 // pred_fallthru
      _
    // Predicated region
    $region10: #{tpu_custom_call.1} parent=1 // pred_check
      _
    $region11: #{tpu_custom_call.1} parent=1 // pred_check_branch
      %41 = sbr.rel (0) target = $region13
    $region12: #{tpu_custom_call.1} parent=1 // pred_region
      _
    $region13: #{tpu_custom_call.1} parent=1 // pred_fallthru
      _
    // Predicated region
    $region14: #{tpu_custom_call.1} parent=1 // pred_check
      _
    $region15: #{tpu_custom_call.1} parent=1 // pred_check_branch
      %43 = sbr.rel (0) target = $region17
    $region16: #{tpu_custom_call.1} parent=1 // pred_region
      %45 = vsyncadd [#allocation6], 0
      %s46 = sshll.u32 %s3, 4
      %s47 = int_to_ptr.hbm [resolvable:$true] %s46
      %s48 = sshll.u32 [#allocation7], 4
      %s49 = int_to_ptr.vmem [resolvable:$true] %s48
      %54 = dma.hbm_to_vmem [thread:$0]  %s47, 2048, %s49, [#allocation6], 128, 128, 8
    $region17: #{tpu_custom_call.1} parent=1 // pred_fallthru
      _
    // Predicated region
    $region18: #{tpu_custom_call.1} parent=1 // pred_check
      _
    $region19: #{tpu_custom_call.1} parent=1 // pred_check_branch
      %56 = sbr.rel (0) target = $region21
    $region20: #{tpu_custom_call.1} parent=1 // pred_region
      _
    $region21: #{tpu_custom_call.1} parent=1 // pred_fallthru
      _
    // Predicated region
    $region22: #{tpu_custom_call.1} parent=1 // pred_check
      _
    $region23: #{tpu_custom_call.1} parent=1 // pred_check_branch
      %58 = sbr.rel (0) target = $region25
    $region24: #{tpu_custom_call.1} parent=1 // pred_region
      %60 = vsyncadd [#allocation9], 0
      %s61 = sshll.u32 %s5, 4
      %s62 = int_to_ptr.hbm [resolvable:$true] %s61
      %s63 = sshll.u32 [#allocation8], 4
      %s64 = int_to_ptr.vmem [resolvable:$true] %s63
      %69 = dma.hbm_to_vmem [thread:$0]  %s62, 2048, %s64, [#allocation9], 128, 128, 8
    $region25: #{tpu_custom_call.1} parent=1 // pred_fallthru
      _
    // Predicated region
    $region26: #{tpu_custom_call.1} parent=1 // pred_check
      _
    $region27: #{tpu_custom_call.1} parent=1 // pred_check_branch
      %71 = sbr.rel (0) target = $region29
    $region28: #{tpu_custom_call.1} parent=1 // pred_region
      _
    $region29: #{tpu_custom_call.1} parent=1 // pred_fallthru
      _
    // Predicated region
    $region30: #{tpu_custom_call.1} parent=1 // pred_check
      _
    $region31: #{tpu_custom_call.1} parent=1 // pred_check_branch
      %73 = sbr.rel (0) target = $region33
    $region32: #{tpu_custom_call.1} parent=1 // pred_region
      %75 = dma.done [#allocation3], 128
    $region33: #{tpu_custom_call.1} parent=1 // pred_fallthru
      _
    // Predicated region
    $region34: #{tpu_custom_call.1} parent=1 // pred_check
      _
    $region35: #{tpu_custom_call.1} parent=1 // pred_check_branch
      %77 = sbr.rel (0) target = $region37
    $region36: #{tpu_custom_call.1} parent=1 // pred_region
      %79 = dma.done [#allocation6], 256
    $region37: #{tpu_custom_call.1} parent=1 // pred_fallthru
      _
    // Predicated region
    $region38: #{tpu_custom_call.1} parent=1 // pred_check
      _
    $region39: #{tpu_custom_call.1} parent=1 // pred_check_branch
      %81 = sbr.rel (0) target = $region41
    $region40: #{tpu_custom_call.1} parent=1 // pred_region
      %83 = dma.done [#allocation6], 2048
    $region41: #{tpu_custom_call.1} parent=1 // pred_fallthru
      _
    // Predicated region
    $region42: #{tpu_custom_call.1} parent=1 // pred_check
      _
    $region43: #{tpu_custom_call.1} parent=1 // pred_check_branch
      %85 = sbr.rel (0) target = $region45
    $region44: #{tpu_custom_call.1} parent=1 // pred_region
      %87 = dma.done [#allocation9], 2048
    $region45: #{tpu_custom_call.1} parent=1 // pred_fallthru
      _
    %v88 = vld [vmem:[#allocation2] sm:$0xff]
    %v89 = vld [vmem:[#allocation5] sm:$0xff]
    %v90 = vld [vmem:[#allocation5 + $0x8] sm:$0xff]
    %v91 = vld [vmem:[%s2] sm:$0x1]
    %v93 = vperm.slane %v91, 0
    %vm95 = vcmask 130048
    %v97 = vsel %vm95, %v88, 0
    %99 = vmatpush.msra.mxu0 0.0
    %100 = vmatpush.msra.mxu0 0.0
    %101 = vmatpush.msra.mxu0 0.0
    %102 = vmatpush.msra.mxu0 0.0
    %103 = vmatpush.msra.mxu0 0.0
    %104 = vmatpush.msra.mxu0 0.0
    %105 = vmatpush.msra.mxu0 0.0
    %106 = vmatpush.msra.mxu0 0.0
    %107 = vmatpush.msra.mxu0 0.0
    %108 = vmatpush.msra.mxu0 0.0
    %109 = vmatpush.msra.mxu0 0.0
    %110 = vmatpush.msra.mxu0 0.0
    %111 = vmatpush.msra.mxu0 0.0
    %112 = vmatpush.msra.mxu0 0.0
    %113 = vmatpush.msra.mxu0 %v90
    %114 = vmatpush.msra.mxu0 %v89
    %115 = vmatmul.f32.gmra.mxu0 %v97
    %v116 = vpop.f32.mrf.mxu0
    %v117 = vadd.f32 %v93, %v116
    %118 = vdwg.mxu0
    %v119 = vmax.f32 %v117, 0.0
    %v120 = vld [vmem:[#allocation7] sm:$0xff]
    %v121 = vld [vmem:[#allocation7 + $0x8] sm:$0xff]
    %v122 = vld [vmem:[#allocation7 + $0x10] sm:$0xff]
    %v123 = vld [vmem:[#allocation7 + $0x18] sm:$0xff]
    %v124 = vld [vmem:[#allocation7 + $0x20] sm:$0xff]
    %v125 = vld [vmem:[#allocation7 + $0x28] sm:$0xff]
    %v126 = vld [vmem:[#allocation7 + $0x30] sm:$0xff]
    %v127 = vld [vmem:[#allocation7 + $0x38] sm:$0xff]
    %v128 = vld [vmem:[#allocation7 + $0x40] sm:$0xff]
    %v129 = vld [vmem:[#allocation7 + $0x48] sm:$0xff]
    %v130 = vld [vmem:[#allocation7 + $0x50] sm:$0xff]
    %v131 = vld [vmem:[#allocation7 + $0x58] sm:$0xff]
    %v132 = vld [vmem:[#allocation7 + $0x60] sm:$0xff]
    %v133 = vld [vmem:[#allocation7 + $0x68] sm:$0xff]
    %v134 = vld [vmem:[#allocation7 + $0x70] sm:$0xff]
    %v135 = vld [vmem:[#allocation7 + $0x78] sm:$0xff]
    %v136 = vld [vmem:[%s4] sm:$0x1]
    %v138 = vperm.slane %v136, 0
    %140 = vmatpush.msra.mxu0 %v135
    %141 = vmatpush.msra.mxu0 %v134
    %142 = vmatpush.msra.mxu0 %v133
    %143 = vmatpush.msra.mxu0 %v132
    %144 = vmatpush.msra.mxu0 %v131
    %145 = vmatpush.msra.mxu0 %v130
    %146 = vmatpush.msra.mxu0 %v129
    %147 = vmatpush.msra.mxu0 %v128
    %148 = vmatpush.msra.mxu0 %v127
    %149 = vmatpush.msra.mxu0 %v126
    %150 = vmatpush.msra.mxu0 %v125
    %151 = vmatpush.msra.mxu0 %v124
    %152 = vmatpush.msra.mxu0 %v123
    %153 = vmatpush.msra.mxu0 %v122
    %154 = vmatpush.msra.mxu0 %v121
    %155 = vmatpush.msra.mxu0 %v120
    %156 = vmatmul.f32.gmra.mxu0 %v119
    %v157 = vpop.f32.mrf.mxu0
    %v158 = vadd.f32 %v138, %v157
    %159 = vdwg.mxu0
    %v160 = vmax.f32 %v158, 0.0
    %v161 = vld [vmem:[#allocation8] sm:$0xff]
    %v162 = vld [vmem:[#allocation8 + $0x8] sm:$0xff]
    %v163 = vld [vmem:[#allocation8 + $0x10] sm:$0xff]
    %v164 = vld [vmem:[#allocation8 + $0x18] sm:$0xff]
    %v165 = vld [vmem:[#allocation8 + $0x20] sm:$0xff]
    %v166 = vld [vmem:[#allocation8 + $0x28] sm:$0xff]
    %v167 = vld [vmem:[#allocation8 + $0x30] sm:$0xff]
    %v168 = vld [vmem:[#allocation8 + $0x38] sm:$0xff]
    %v169 = vld [vmem:[#allocation8 + $0x40] sm:$0xff]
    %v170 = vld [vmem:[#allocation8 + $0x48] sm:$0xff]
    %v171 = vld [vmem:[#allocation8 + $0x50] sm:$0xff]
    %v172 = vld [vmem:[#allocation8 + $0x58] sm:$0xff]
    %v173 = vld [vmem:[#allocation8 + $0x60] sm:$0xff]
    %v174 = vld [vmem:[#allocation8 + $0x68] sm:$0xff]
    %v175 = vld [vmem:[#allocation8 + $0x70] sm:$0xff]
    %v176 = vld [vmem:[#allocation8 + $0x78] sm:$0xff]
    %v177 = vld [vmem:[%s6] sm:$0x1]
    %v179 = vperm.slane %v177, 0
    %181 = vmatpush.msra.mxu0 %v176
    %182 = vmatpush.msra.mxu0 %v175
    %183 = vmatpush.msra.mxu0 %v174
    %184 = vmatpush.msra.mxu0 %v173
    %185 = vmatpush.msra.mxu0 %v172
    %186 = vmatpush.msra.mxu0 %v171
    %187 = vmatpush.msra.mxu0 %v170
    %188 = vmatpush.msra.mxu0 %v169
    %189 = vmatpush.msra.mxu0 %v168
    %190 = vmatpush.msra.mxu0 %v167
    %191 = vmatpush.msra.mxu0 %v166
    %192 = vmatpush.msra.mxu0 %v165
    %193 = vmatpush.msra.mxu0 %v164
    %194 = vmatpush.msra.mxu0 %v163
    %195 = vmatpush.msra.mxu0 %v162
    %196 = vmatpush.msra.mxu0 %v161
    %197 = vmatmul.f32.gmra.mxu0 %v160
    %v198 = vpop.f32.mrf.mxu0
    %v199 = vadd.f32 %v179, %v198
    %200 = vdwg.mxu0
    %201 = vst [vmem:[#allocation10] sm:$0xff] %v199
    // Predicated region
    $region46: #{tpu_custom_call.1} parent=1 // pred_check
      _
    $region47: #{tpu_custom_call.1} parent=1 // pred_check_branch
      %203 = sbr.rel (0) target = $region49
    $region48: #{tpu_custom_call.1} parent=1 // pred_region
      %205 = vsyncadd [#allocation4], 0
      %s207 = sshll.u32 [#allocation10], 4
      %s208 = int_to_ptr.vmem [resolvable:$true] %s207
      %s209 = sshll.u32 %s7, 4
      %s210 = int_to_ptr.hbm [resolvable:$true] %s209
      %212 = dma.vmem_to_hbm [thread:$0]  %s208, 128, %s210, [#allocation4]
    $region49: #{tpu_custom_call.1} parent=1 // pred_fallthru
      _
    // Predicated region
    $region50: #{tpu_custom_call.1} parent=1 // pred_check
      _
    $region51: #{tpu_custom_call.1} parent=1 // pred_check_branch
      %214 = sbr.rel (0) target = $region53
    $region52: #{tpu_custom_call.1} parent=1 // pred_region
      %216 = dma.done [#allocation4], 128
    $region53: #{tpu_custom_call.1} parent=1 // pred_fallthru
      _
    %217 = vsyncpa [#allocation3], 1
    %218 = vsyncpa [#allocation6], 1
    %219 = vsyncpa [#allocation9], 1
    %220 = vsyncpa [#allocation4], 1

</llo_original>
